<compile_context>
chip_gen: v5e
topology: v5e:2x2
jax: 0.10.0
libtpu: 0.0.40
codegen_flags: <defaults>
</compile_context>

<pallas_src>
import numpy as np
import jax
import jax.numpy as jnp
from jax.experimental import pallas as pl
from jax.experimental.pallas import tpu as pltpu


def make_positional_encoding(timp: int, dim_embedding: int) -> jnp.ndarray:
    """Deterministic sinusoidal table, matching the PyTorch __init__ exactly."""
    factori = np.array(
        [1.0 / 10000.0 ** (2 * (j // 2) / dim_embedding) for j in range(dim_embedding)],
        dtype=np.float64,
    )
    pozitii = np.arange(timp, dtype=np.float64)[:, None]          # (timp, 1)
    valori = (pozitii * factori[None, :]).astype(np.float32)       # (timp, dim)
    rezultat = np.zeros((timp, dim_embedding), dtype=np.float32)
    rezultat[:, 0::2] = np.sin(valori[:, 0::2])
    rezultat[:, 1::2] = np.cos(valori[:, 1::2])
    return jnp.asarray(rezultat[None, :, :], dtype=jnp.float32)    # (1, timp, dim)


def _pe_add_kernel(x_ref, enc_ref, o_ref):
    # x_ref: (bm, bn) block of flattened input rows
    # enc_ref: (1, bn) block of flattened encoding, broadcast over rows (VPU add)
    o_ref[...] = x_ref[...] + enc_ref[...]


def _choose_tiles(batch: int, n_cols: int, itemsize: int):
    # Row tile: whole batch when small (block dim == full array dim is always
    # legal); otherwise a multiple-of-8 tile.
    bm = batch if batch <= 256 else 256
    # Column (lane) tile: large multiple of 128, sized so the double-buffered
    # working set (x in + out, 2 buffers each, plus the enc tile) stays well
    # under the default scoped-VMEM limit on every chip (v5e/v6e/v7x).
    vmem_budget = 8 * 1024 * 1024
    bytes_per_col = (2 * 2 * bm + 2) * itemsize
    bn = (vmem_budget // bytes_per_col) // 128 * 128
    bn = int(max(128, min(bn, 4096)))
    if n_cols <= bn or n_cols < 128:
        bn = n_cols  # single full-width block (full-extent dim is always legal)
    return bm, bn


def positional_encoding_forward(strat: jnp.ndarray, encoding: jnp.ndarray) -> jnp.ndarray:
    """strat: (B, T, D); encoding: (1, TIMP, D) with TIMP >= T."""
    B, T, D = strat.shape
    _, TIMP, De = encoding.shape
    if T > TIMP:
        raise ValueError(f"sequence length {T} exceeds encoding table length {TIMP}")
    if De != D:
        raise ValueError(f"embedding dim mismatch: input {D} vs table {De}")

    if encoding.dtype != strat.dtype:
        encoding = encoding.astype(strat.dtype)   # avoid mixed-dtype add in kernel

    N = T * D
    x2 = strat.reshape(B, N)                      # free reshape, lane-dense slab
    enc2 = encoding.reshape(1, TIMP * D)          # free reshape; no HBM slice copy
    itemsize = jnp.dtype(strat.dtype).itemsize

    bm, bn = _choose_tiles(B, N, itemsize)
    grid = (pl.cdiv(B, bm), pl.cdiv(N, bn))

    out2 = pl.pallas_call(
        _pe_add_kernel,
        out_shape=jax.ShapeDtypeStruct((B, N), strat.dtype),
        grid=grid,
        in_specs=[
            pl.BlockSpec((bm, bn), lambda i, j: (i, j)),   # x rows/cols
            pl.BlockSpec((1, bn), lambda i, j: (0, j)),    # encoding cols, bcast rows
        ],
        out_specs=pl.BlockSpec((bm, bn), lambda i, j: (i, j)),
        compiler_params=pltpu.CompilerParams(
            dimension_semantics=("parallel", "parallel"),
        ),
        cost_estimate=pl.CostEstimate(
            flops=B * N,
            transcendentals=0,
            bytes_accessed=(2 * B * N + N) * itemsize,
        ),
    )(x2, enc2)

    return out2.reshape(B, T, D)


if __name__ == "__main__":
    key = jax.random.PRNGKey(0)
    k1, k2 = jax.random.split(key)

    # Case 1: toy shapes implied by the module (batch=2, seq=8, dim_embedding=32).
    TIMP1, DIM1, B1, T1 = 16, 32, 2, 8
    x1 = jax.random.normal(k1, (B1, T1, DIM1), dtype=jnp.float32)
    enc1 = make_positional_encoding(TIMP1, DIM1)
    out1 = jax.block_until_ready(positional_encoding_forward(x1, enc1))
    ref1 = x1 + enc1[:, :T1, :]
    np.testing.assert_allclose(np.asarray(out1), np.asarray(ref1), rtol=1e-6, atol=1e-6)

    # Case 2: still small, but exercises multi-block column tiling and partial
    # edge blocks (T*D = 9600 -> three 4096-wide column tiles, last one partial;
    # table longer than T so the last enc tile spans past T*D harmlessly).
    TIMP2, DIM2, B2, T2 = 128, 96, 4, 100
    x2 = jax.random.normal(k2, (B2, T2, DIM2), dtype=jnp.float32)
    enc2 = make_positional_encoding(TIMP2, DIM2)
    out2 = jax.block_until_ready(positional_encoding_forward(x2, enc2))
    ref2 = x2 + enc2[:, :T2, :]
    np.testing.assert_allclose(np.asarray(out2), np.asarray(ref2), rtol=1e-6, atol=1e-6)

    print("KERNEL_OK")
</pallas_src>

<mosaic_0001>
module attributes {stable_mosaic.version = 11 : i64} {
  func.func @_pe_add_kernel(%arg0: i32, %arg1: i32, %arg2: memref<2x256xf32, #tpu.memory_space<vmem>>, %arg3: memref<1x256xf32, #tpu.memory_space<vmem>>, %arg4: memref<2x256xf32, #tpu.memory_space<vmem>>) attributes {dimension_semantics = [#tpu.dimension_semantics<parallel>, #tpu.dimension_semantics<parallel>], iteration_bounds = array<i64: 1, 1>, scalar_prefetch = 0 : i64, scratch_operands = 0 : i64, tpu.core_type = #tpu.core_type<tc>, window_params = [{transform_indices = @transform_0, window_bounds = array<i64: 2, 256>}, {transform_indices = @transform_1, window_bounds = array<i64: 1, 256>}, {transform_indices = @transform_2, window_bounds = array<i64: 2, 256>}]} {
    %c0 = arith.constant 0 : index
    %c0_0 = arith.constant 0 : index
    %0 = vector.load %arg2[%c0, %c0_0] : memref<2x256xf32, #tpu.memory_space<vmem>>, vector<2x256xf32>
    %c0_1 = arith.constant 0 : index
    %c0_2 = arith.constant 0 : index
    %1 = vector.load %arg3[%c0_1, %c0_2] : memref<1x256xf32, #tpu.memory_space<vmem>>, vector<1x256xf32>
    %2 = vector.broadcast %1 : vector<1x256xf32> to vector<2x256xf32>
    %3 = arith.addf %0, %2 : vector<2x256xf32>
    %c0_3 = arith.constant 0 : index
    %c0_4 = arith.constant 0 : index
    %4 = vector.load %arg4[%c0_3, %c0_4] : memref<2x256xf32, #tpu.memory_space<vmem>>, vector<2x256xf32>
    tpu.vector_store %arg4[%c0_3, %c0_4], %3 {strides = array<i32>} : memref<2x256xf32, #tpu.memory_space<vmem>>, vector<2x256xf32>,
    return
  }
  func.func @transform_0(%arg0: i32, %arg1: i32) -> (i32, i32) {
    %c0_i32 = arith.constant 0 : i32
    return %arg0, %arg1 : i32, i32
  }
  func.func @transform_1(%arg0: i32, %arg1: i32) -> (i32, i32) {
    %c0_i32 = arith.constant 0 : i32
    %c0_i32_0 = arith.constant 0 : i32
    return %c0_i32, %arg1 : i32, i32
  }
  func.func @transform_2(%arg0: i32, %arg1: i32) -> (i32, i32) {
    %c0_i32 = arith.constant 0 : i32
    return %arg0, %arg1 : i32, i32
  }
}

</mosaic_0001>

<llo_original>
// kernel: tpu_custom_call.1
$region0: #{tpu_custom_call.1}
  #allocation0 [shape = 'u32[]', space=smem, size = 0x4, offset = 0x4, fixed_abs, tag = 'smem constant byte address 0x4 - core index']
  #allocation1 [shape = 'u32[72,128]{1,0:T(1,128)}', space=vmem, size = 0x9000, scoped, tag = 'internal scratch']
  %s0 = inlined_call_operand.hbm [shape: f32[2,256], index: 0, kind: input, shape index: {}]
  %s1 = inlined_call_operand.hbm [shape: f32[1,512], index: 1, kind: input, shape index: {}]
  %s2 = inlined_call_operand.hbm [shape: f32[2,256], index: 2, kind: output, shape index: {}]
  %s3 = sld [smem:[#allocation0]]
  $region26: #{tpu_custom_call.1} parent=0
    _
  %s5 = ssub.s32 1, %s3
  %s6 = scalar_select 0, %s5, %s3
  $region1: #{tpu_custom_call.1} parent=0
    #allocation2 [shape = 'u8[2048]{0}', space=vmem, size = 0x800, scoped, tag = 'input window, operand 0, single buffered']
    #allocation3 [shape = 's32[1]{0}', space=sflag, size = 0x4, scoped, tag = 'scoped memory for tpu_custom_call.1']
    #allocation4 [shape = 's32[1]{0}', space=sflag, size = 0x4, scoped, tag = 'scoped memory for tpu_custom_call.1']
    #allocation5 [shape = 'u8[1024]{0}', space=vmem, size = 0x400, scoped, tag = 'input window, operand 1, single buffered']
    #allocation6 [shape = 's32[1]{0}', space=sflag, size = 0x4, scoped, tag = 'scoped memory for tpu_custom_call.1']
    #allocation7 [shape = 'u8[2048]{0}', space=vmem, size = 0x800, scoped, tag = 'output window, operand 0, single buffered']
    %7 = vsyncpa [#allocation3], 0
    %8 = vsyncpa [#allocation6], 0
    %9 = vsyncpa [#allocation4], 0
    // Predicated region
    $region2: #{tpu_custom_call.1} parent=1 // pred_check
      _
    $region3: #{tpu_custom_call.1} parent=1 // pred_check_branch
      %11 = sbr.rel (0) target = $region5
    $region4: #{tpu_custom_call.1} parent=1 // pred_region
      %13 = vsyncadd [#allocation3], 0
      %s15 = sshll.u32 %s0, 4
      %s16 = int_to_ptr.hbm [resolvable:$true] %s15
      %s17 = sshll.u32 [#allocation2], 4
      %s18 = int_to_ptr.vmem [resolvable:$true] %s17
      %20 = dma.hbm_to_vmem [thread:$0]  %s16, 64, %s18, [#allocation3]
    $region5: #{tpu_custom_call.1} parent=1 // pred_fallthru
      _
    // Predicated region
    $region6: #{tpu_custom_call.1} parent=1 // pred_check
      _
    $region7: #{tpu_custom_call.1} parent=1 // pred_check_branch
      %22 = sbr.rel (0) target = $region9
    $region8: #{tpu_custom_call.1} parent=1 // pred_region
      %24 = vsyncadd [#allocation6], 0
      %s26 = sshll.u32 %s1, 4
      %s27 = int_to_ptr.hbm [resolvable:$true] %s26
      %s28 = sshll.u32 [#allocation5], 4
      %s29 = int_to_ptr.vmem [resolvable:$true] %s28
      %31 = dma.hbm_to_vmem [thread:$0]  %s27, 32, %s29, [#allocation6]
    $region9: #{tpu_custom_call.1} parent=1 // pred_fallthru
      _
    // Predicated region
    $region10: #{tpu_custom_call.1} parent=1 // pred_check
      _
    $region11: #{tpu_custom_call.1} parent=1 // pred_check_branch
      %33 = sbr.rel (0) target = $region13
    $region12: #{tpu_custom_call.1} parent=1 // pred_region
      %35 = dma.done [#allocation3], 64
    $region13: #{tpu_custom_call.1} parent=1 // pred_fallthru
      _
    // Predicated region
    $region14: #{tpu_custom_call.1} parent=1 // pred_check
      _
    $region15: #{tpu_custom_call.1} parent=1 // pred_check_branch
      %37 = sbr.rel (0) target = $region17
    $region16: #{tpu_custom_call.1} parent=1 // pred_region
      %39 = dma.done [#allocation6], 32
    $region17: #{tpu_custom_call.1} parent=1 // pred_fallthru
      _
    %v40 = vld [vmem:[#allocation2] sm:$0xf]
    %v41 = vld [vmem:[#allocation5] sm:$0x3]
    %v43 = vperm.slane %v41, 0
    %v44 = vperm.slane %v41, 1
    %v45 = vrot.slane %v44, 6
    %vm46 = vcmask 1041408
    %v47 = vsel %vm46, %v43, %v45
    %v49 = vadd.f32 %v40, %v47
    %50 = vst [vmem:[#allocation7] sm:$0xf] %v49
    // Predicated region
    $region18: #{tpu_custom_call.1} parent=1 // pred_check
      _
    $region19: #{tpu_custom_call.1} parent=1 // pred_check_branch
      %52 = sbr.rel (0) target = $region21
    $region20: #{tpu_custom_call.1} parent=1 // pred_region
      %54 = vsyncadd [#allocation4], 0
      %s56 = sshll.u32 [#allocation7], 4
      %s57 = int_to_ptr.vmem [resolvable:$true] %s56
      %s58 = sshll.u32 %s2, 4
      %s59 = int_to_ptr.hbm [resolvable:$true] %s58
      %61 = dma.vmem_to_hbm [thread:$0]  %s57, 64, %s59, [#allocation4]
    $region21: #{tpu_custom_call.1} parent=1 // pred_fallthru
      _
    // Predicated region
    $region22: #{tpu_custom_call.1} parent=1 // pred_check
      _
    $region23: #{tpu_custom_call.1} parent=1 // pred_check_branch
      %63 = sbr.rel (0) target = $region25
    $region24: #{tpu_custom_call.1} parent=1 // pred_region
      %65 = dma.done [#allocation4], 64
    $region25: #{tpu_custom_call.1} parent=1 // pred_fallthru
      _
    %66 = vsyncpa [#allocation3], 1
    %67 = vsyncpa [#allocation6], 1
    %68 = vsyncpa [#allocation4], 1

</llo_original>
